<compile_context>
chip_gen: v7x
topology: tpu7x:2x2x1
jax: 0.10.0
libtpu: 0.0.40
codegen_flags: <defaults>
</compile_context>

<pallas_src>
import jax
import jax.numpy as jnp
from jax.experimental import pallas as pl
from jax.experimental.pallas import tpu as pltpu


# ----------------------------------------------------------------------------
# Fused kernel (one grid step per batch element):
#   1 MXU matmul for all timesteps -> unrolled LTC recurrence -> folded head.
# Layout: channels on sublanes, (t, H*W) flattened on lanes (lane-dense).
# ----------------------------------------------------------------------------
def spikefpn_kernel(patch_ref,   # (1, K9p, T*HW) bf16  im2col patches, batch b
                    wmat_ref,    # (Coutp, K9p)  bf16   conv weight (tap-major)
                    prm_ref,     # (Coutp, 8)    f32    [bn_s, bn_b, tau_m, vleak, cm, erev, 0, 0]
                    wfin_ref,    # (Coutp, HW)   f32    folded head weight
                    bfin_ref,    # (1, 1)        f32    folded head bias
                    o_ref):      # (1, 1, 1)     f32    output for batch b
    Coutp, HW = wfin_ref.shape
    THW = patch_ref.shape[2]
    T = THW // HW

    # --- one MXU matmul covering every timestep (K=48, N=T*HW=1280) ----------
    wih_all = jnp.dot(wmat_ref[...], patch_ref[0],
                      preferred_element_type=jnp.float32)        # (Coutp, T*HW)

    prm = prm_ref[...]                                           # (Coutp, 8)
    # Eval-mode BN applied once to the whole slab (per-channel scale/bias).
    wih_all = wih_all * prm[:, 0:1] + prm[:, 1:2]

    # Hoisted (Coutp, 1) -> (Coutp, HW) lane broadcasts (JAX does not CSE
    # broadcast_in_dim; doing this inside the loop would repeat it T times).
    tau_m = jnp.broadcast_to(prm[:, 2:3], (Coutp, HW))
    vleak = jnp.broadcast_to(prm[:, 3:4], (Coutp, HW))
    cm = jnp.broadcast_to(prm[:, 4:5], (Coutp, HW))
    erev = jnp.broadcast_to(prm[:, 5:6], (Coutp, HW))

    # --- LTC recurrence: T is static, so this fully unrolls (VPU/EUP only) ---
    v = jnp.zeros((Coutp, HW), jnp.float32)
    for t in range(T):                                  # static unroll, T = 5
        wih = wih_all[:, t * HW:(t + 1) * HW]           # static lane slice
        sig = jax.nn.sigmoid(wih)
        # Exact divide (reference semantics); the /(1 + 1e-8) factor of the
        # reference (denominator == 1 in this branch) is dropped as dead work.
        v = jax.nn.sigmoid(tau_m * v / (vleak + cm * sig) + wih * erev)

    # --- folded head: pyramid projections + heads + adaptive pool + Linear ---
    # Everything after the last sigmoid is linear, so it composes offline into
    # a single (Coutp, HW) weight and a scalar bias.
    z = jnp.sum(v * wfin_ref[...], axis=1, keepdims=True)        # (Coutp, 1)
    z = jnp.sum(z, axis=0, keepdims=True)                        # (1, 1)
    o_ref[0] = jax.nn.sigmoid(z + bfin_ref[...])


# ----------------------------------------------------------------------------
# Wrapper
# ----------------------------------------------------------------------------
def spikefpn_ncars_forward(x, params):
    """x: (B, T, C, H, W) float32 -> (B, 1) float32."""
    B, T, C, H, W = x.shape
    assert H % 8 == 0 and W % 8 == 0, "pyramid stand-in expects H, W % 8 == 0"
    HW = H * W
    K9 = 9 * C
    Coutp, K9p = params['wmat'].shape

    x = x.astype(jnp.float32)

    # Boundary im2col (pure layout, no FLOPs): rows = (dy*3+dx)*C + ci padded
    # to K9p, columns = t*HW + i*W + j, cast to bf16 (halves patch DMA bytes;
    # the matmul accumulates in f32).
    # TODO(synk): at larger H*W move the 9 taps in-kernel from a padded
    # (C, (H+2)*(W+2)) layout to avoid the 9x HBM read amplification.
    xp = jnp.pad(x, ((0, 0), (0, 0), (0, 0), (1, 1), (1, 1)))
    taps = [xp[:, :, :, dy:dy + H, dx:dx + W]
            for dy in range(3) for dx in range(3)]
    patches = jnp.stack(taps, axis=2).reshape(B, T, K9, HW)       # (B,T,9C,HW)
    patches = jnp.transpose(patches, (0, 2, 1, 3)).reshape(B, K9, T * HW)
    patches = jnp.pad(patches, ((0, 0), (0, K9p - K9), (0, 0)))
    patches = patches.astype(jnp.bfloat16)                        # (B,K9p,T*HW)

    out = pl.pallas_call(
        spikefpn_kernel,
        out_shape=jax.ShapeDtypeStruct((B, 1, 1), jnp.float32),
        grid_spec=pltpu.PrefetchScalarGridSpec(
            num_scalar_prefetch=0,
            grid=(B,),                                # one step per batch elem
            in_specs=[
                pl.BlockSpec((1, K9p, T * HW), lambda b: (b, 0, 0)),
                pl.BlockSpec((Coutp, K9p), lambda b: (0, 0)),
                pl.BlockSpec((Coutp, 8), lambda b: (0, 0)),
                pl.BlockSpec((Coutp, HW), lambda b: (0, 0)),
                pl.BlockSpec((1, 1), lambda b: (0, 0)),
            ],
            out_specs=pl.BlockSpec((1, 1, 1), lambda b: (b, 0, 0)),
        ),
        compiler_params=pltpu.CompilerParams(
            dimension_semantics=("parallel",)),       # v7x: B across 2 TCs
    )(patches, params['wmat'], params['ltc'], params['wfin'], params['bfin'])

    return out.reshape(B, 1)


# ----------------------------------------------------------------------------
# Parameter construction (deterministic, in-script); returns both the folded,
# padded kernel parameters and the raw ones used by the pure-JAX reference.
# ----------------------------------------------------------------------------
def init_params(key, C=5, H=16, W=16, num_classes=2, num_anchors=3,
                coutp=8, k9p=48):
    ks = jax.random.split(key, 20)
    Cin = Cout = C
    HW = H * W
    head_out = num_anchors * (1 + num_classes + 4)                # 21

    # ConvLTC conv weight: xavier_normal_ on (Cout, Cin, 3, 3), no bias.
    fan_in, fan_out = Cin * 9, Cout * 9
    std = (2.0 / (fan_in + fan_out)) ** 0.5
    w_conv = std * jax.random.normal(ks[0], (Cout, Cin, 3, 3), jnp.float32)
    # (Cout, 9*Cin), column = (dy*3+dx)*Cin + ci (tap-major) -> matches im2col.
    wmat = jnp.transpose(w_conv, (0, 2, 3, 1)).reshape(Cout, 9 * Cin)
    wmat_p = jnp.zeros((coutp, k9p), jnp.float32).at[:Cout, :9 * Cin].set(wmat)
    wmat_p = wmat_p.astype(jnp.bfloat16)

    # BatchNorm2d folded to per-channel scale/bias (eval-mode statistics).
    gamma = 1.0 + 0.1 * jax.random.normal(ks[1], (Cout,), jnp.float32)
    beta = 0.1 * jax.random.normal(ks[2], (Cout,), jnp.float32)
    rmean = 0.1 * jax.random.normal(ks[3], (Cout,), jnp.float32)
    rvar = 1.0 + 0.1 * jnp.abs(jax.random.normal(ks[4], (Cout,), jnp.float32))
    inv = gamma / jnp.sqrt(rvar + 1e-5)
    bn_scale = inv
    bn_bias = beta - rmean * inv

    cm = 1.0 + 0.1 * jax.random.normal(ks[5], (Cout,), jnp.float32)
    vleak = 1.0 + 0.1 * jax.random.normal(ks[6], (Cout,), jnp.float32)
    tau_m = (0.5 - 0.8) * jax.random.uniform(ks[7], (Cout,), jnp.float32) + 0.8
    erev = 1.0 + 0.1 * jax.random.normal(ks[8], (Cout,), jnp.float32)

    # Channel padding 5 -> 8: padded channels get zero wih (scale/bias = 0), a
    # safe denominator (vleak = cm = 1), and zero weight in the folded head.
    def pad1(p, fill):
        return jnp.concatenate(
            [p, jnp.full((coutp - Cout,), fill, jnp.float32)])

    zeros = jnp.zeros((coutp,), jnp.float32)
    ltc = jnp.stack([pad1(bn_scale, 0.0), pad1(bn_bias, 0.0), pad1(tau_m, 0.0),
                     pad1(vleak, 1.0), pad1(cm, 1.0), pad1(erev, 0.0),
                     zeros, zeros], axis=1)                        # (coutp, 8)

    # Stand-in pyramid 1x1 projections to the reference head widths.
    c3, c2, c1 = 192, 384, 768
    proj3 = jax.random.normal(ks[9], (C, c3), jnp.float32) / jnp.sqrt(C)
    proj2 = jax.random.normal(ks[10], (C, c2), jnp.float32) / jnp.sqrt(C)
    proj1 = jax.random.normal(ks[11], (C, c1), jnp.float32) / jnp.sqrt(C)
    w3 = 0.05 * jax.random.normal(ks[12], (c3, head_out), jnp.float32)
    b3 = 0.05 * jax.random.normal(ks[13], (head_out,), jnp.float32)
    w2 = 0.05 * jax.random.normal(ks[14], (c2, head_out), jnp.float32)
    b2 = 0.05 * jax.random.normal(ks[15], (head_out,), jnp.float32)
    w1 = 0.05 * jax.random.normal(ks[16], (c1, head_out), jnp.float32)
    b1 = 0.05 * jax.random.normal(ks[17], (head_out,), jnp.float32)

    # Fold projections into the heads: (f @ proj) @ w + b == f @ (proj @ w) + b
    wh = jnp.concatenate([proj3 @ w3, proj2 @ w2, proj1 @ w1], axis=1)  # (C,63)
    bh = jnp.concatenate([b3, b2, b1])                                  # (63,)

    # Final Linear(252 -> 1); PyTorch flatten order is c*4 + (qi*2 + qj).
    wl = 0.05 * jax.random.normal(ks[18], (3 * head_out * 4,), jnp.float32)
    bl = 0.05 * jax.random.normal(ks[19], (1, 1), jnp.float32)
    wl2 = wl.reshape(3 * head_out, 4)                                   # (63,4)

    # Quadrant-average-pool matrix (HW, 4), column p = qi*2 + qj.  Quadrant
    # means commute with every linear op downstream (avg-pool pyramid, 1x1
    # projections, heads), so pooling first is exact.
    qi = jnp.arange(H) // (H // 2)
    qj = jnp.arange(W) // (W // 2)
    q = (qi[:, None] * 2 + qj[None, :]).reshape(HW)
    pool_mat = (q[:, None] == jnp.arange(4)[None, :]).astype(jnp.float32) \
        * (4.0 / HW)

    # Full head fold:
    #   z = sum_{c,p} wl2[c,p]*(sum_j wh[j,c]*pooled[j,p] + bh[c]) + bl
    #     = sum_{j,n} v_T[j,n]*wfin[j,n] + bfin
    A = wh @ wl2                                # (C, 4)
    wfin_c = A @ pool_mat.T                     # (C, HW)
    wfin = jnp.zeros((coutp, HW), jnp.float32).at[:C, :].set(wfin_c)
    bfin = (jnp.sum(wl2 * bh[:, None]) + bl[0, 0]).reshape(1, 1)

    params = dict(wmat=wmat_p, ltc=ltc, wfin=wfin, bfin=bfin)
    raw = dict(w_conv=w_conv, bn_scale=bn_scale, bn_bias=bn_bias,
               tau_m=tau_m, vleak=vleak, cm=cm, erev=erev,
               proj3=proj3, proj2=proj2, proj1=proj1,
               w3=w3, b3=b3, w2=w2, b2=b2, w1=w1, b1=b1, wl=wl, bl=bl)
    return params, raw


# ----------------------------------------------------------------------------
# Pure-JAX reference (unfolded, mirrors the original stand-in structure)
# ----------------------------------------------------------------------------
def reference_forward(x, raw):
    B, T, C, H, W = x.shape
    x = x.astype(jnp.float32)

    def cc(p):  # per-channel param -> NCHW broadcast
        return p[None, :, None, None]

    v = jnp.zeros((B, C, H, W), jnp.float32)
    for t in range(T):
        wih = jax.lax.conv_general_dilated(
            x[:, t], raw['w_conv'], (1, 1), 'SAME',
            dimension_numbers=('NCHW', 'OIHW', 'NCHW'))
        wih = wih * cc(raw['bn_scale']) + cc(raw['bn_bias'])
        sig = jax.nn.sigmoid(wih)
        numer = (cc(raw['tau_m']) * v / (cc(raw['vleak']) + cc(raw['cm']) * sig)
                 + wih * cc(raw['erev']))
        v = jax.nn.sigmoid(numer / (1.0 + 1e-8))
    feat = jnp.transpose(v, (0, 2, 3, 1))                          # (B, H, W, C)

    def avgpool2(z):
        b, h, w, c = z.shape
        return jnp.mean(z.reshape(b, h // 2, 2, w // 2, 2, c), axis=(2, 4))

    def adaptive22(z):
        b, h, w, c = z.shape
        return jnp.mean(z.reshape(b, 2, h // 2, 2, w // 2, c), axis=(2, 4))

    f3 = avgpool2(feat)
    f2 = avgpool2(f3)
    f1 = avgpool2(f2)
    y3 = jnp.einsum('bhwc,cd->bhwd', f3, raw['proj3'])
    y2 = jnp.einsum('bhwc,cd->bhwd', f2, raw['proj2'])
    y1 = jnp.einsum('bhwc,cd->bhwd', f1, raw['proj1'])
    p_s = adaptive22(jnp.einsum('bhwc,cd->bhwd', y3, raw['w3']) + raw['b3'])
    p_m = adaptive22(jnp.einsum('bhwc,cd->bhwd', y2, raw['w2']) + raw['b2'])
    p_l = adaptive22(jnp.einsum('bhwc,cd->bhwd', y1, raw['w1']) + raw['b1'])
    cat = jnp.concatenate([p_s, p_m, p_l], axis=-1)                # (B, 2, 2, 63)
    flat = jnp.transpose(cat, (0, 3, 1, 2)).reshape(B, -1)         # (B, 252)
    z = flat @ raw['wl'].reshape(-1, 1) + raw['bl']
    return jax.nn.sigmoid(z)


if __name__ == "__main__":
    key = jax.random.PRNGKey(0)
    kx, kp = jax.random.split(key)

    B, T, C, H, W = 2, 5, 5, 16, 16          # init_channels=5, time_steps=5
    x = jax.random.normal(kx, (B, T, C, H, W), jnp.float32)
    params, raw = init_params(kp, C=C, H=H, W=W)

    out = jax.jit(spikefpn_ncars_forward)(x, params)
    out = jax.block_until_ready(out)
    assert out.shape == (B, 1) and out.dtype == jnp.float32
    assert bool(jnp.all(jnp.isfinite(out)))

    ref = reference_forward(x, raw)
    err = float(jnp.max(jnp.abs(out - ref)))
    assert err < 1e-2, f"kernel vs reference mismatch: {err}"
    print("KERNEL_OK")
</pallas_src>

<mosaic_0001>
module attributes {stable_mosaic.version = 11 : i64} {
  func.func @spikefpn_kernel(%arg0: i32, %arg1: memref<1x48x1280xbf16, #tpu.memory_space<vmem>>, %arg2: memref<8x48xbf16, #tpu.memory_space<vmem>>, %arg3: memref<8x8xf32, #tpu.memory_space<vmem>>, %arg4: memref<8x256xf32, #tpu.memory_space<vmem>>, %arg5: memref<1x1xf32, #tpu.memory_space<vmem>>, %arg6: memref<1x1x1xf32, #tpu.memory_space<vmem>>) attributes {dimension_semantics = [#tpu.dimension_semantics<parallel>], iteration_bounds = array<i64: 2>, scalar_prefetch = 0 : i64, scratch_operands = 0 : i64, tpu.core_type = #tpu.core_type<tc>, window_params = [{transform_indices = @transform_0, window_bounds = array<i64: 1, 48, 1280>}, {pipeline_mode = #tpu.pipeline_mode<synchronous>, transform_indices = @transform_1, window_bounds = array<i64: 8, 48>}, {pipeline_mode = #tpu.pipeline_mode<synchronous>, transform_indices = @transform_2, window_bounds = array<i64: 8, 8>}, {pipeline_mode = #tpu.pipeline_mode<synchronous>, transform_indices = @transform_3, window_bounds = array<i64: 8, 256>}, {pipeline_mode = #tpu.pipeline_mode<synchronous>, transform_indices = @transform_4, window_bounds = array<i64: 1, 1>}, {transform_indices = @transform_5, window_bounds = array<i64: 1, 1, 1>}]} {
    %c0 = arith.constant 0 : index
    %c0_0 = arith.constant 0 : index
    %0 = vector.load %arg2[%c0, %c0_0] : memref<8x48xbf16, #tpu.memory_space<vmem>>, vector<8x48xbf16>
    %c0_1 = arith.constant 0 : index
    %c0_2 = arith.constant 0 : index
    %c0_3 = arith.constant 0 : index
    %1 = vector.load %arg1[%c0_1, %c0_2, %c0_3] : memref<1x48x1280xbf16, #tpu.memory_space<vmem>>, vector<1x48x1280xbf16>
    %2 = vector.shape_cast %1 : vector<1x48x1280xbf16> to vector<48x1280xbf16>
    %cst = arith.constant dense<0.000000e+00> : vector<8x1280xf32>
    %3 = tpu.matmul %0, %2, %cst {dimension_numbers = #tpu.dot_dimension_numbers<[1], [0], [0], [1], [0, 0, 1, 1], [], []>} : vector<8x48xbf16>, vector<48x1280xbf16>, vector<8x1280xf32> -> vector<8x1280xf32>
    %c0_4 = arith.constant 0 : index
    %c0_5 = arith.constant 0 : index
    %4 = vector.load %arg3[%c0_4, %c0_5] : memref<8x8xf32, #tpu.memory_space<vmem>>, vector<8x8xf32>
    %5 = vector.extract_strided_slice %4 {offsets = [0, 0], sizes = [8, 1], strides = [1, 1]} : vector<8x8xf32> to vector<8x1xf32>
    %6 = vector.broadcast %5 : vector<8x1xf32> to vector<8x1280xf32>
    %7 = arith.mulf %3, %6 : vector<8x1280xf32>
    %8 = vector.extract_strided_slice %4 {offsets = [0, 1], sizes = [8, 1], strides = [1, 1]} : vector<8x8xf32> to vector<8x1xf32>
    %9 = vector.broadcast %8 : vector<8x1xf32> to vector<8x1280xf32>
    %10 = arith.addf %7, %9 : vector<8x1280xf32>
    %11 = vector.extract_strided_slice %4 {offsets = [0, 2], sizes = [8, 1], strides = [1, 1]} : vector<8x8xf32> to vector<8x1xf32>
    %12 = vector.shape_cast %11 : vector<8x1xf32> to vector<8x1xf32>
    %13 = vector.broadcast %12 : vector<8x1xf32> to vector<8x256xf32>
    %14 = vector.extract_strided_slice %4 {offsets = [0, 3], sizes = [8, 1], strides = [1, 1]} : vector<8x8xf32> to vector<8x1xf32>
    %15 = vector.shape_cast %14 : vector<8x1xf32> to vector<8x1xf32>
    %16 = vector.broadcast %15 : vector<8x1xf32> to vector<8x256xf32>
    %17 = vector.extract_strided_slice %4 {offsets = [0, 4], sizes = [8, 1], strides = [1, 1]} : vector<8x8xf32> to vector<8x1xf32>
    %18 = vector.shape_cast %17 : vector<8x1xf32> to vector<8x1xf32>
    %19 = vector.broadcast %18 : vector<8x1xf32> to vector<8x256xf32>
    %20 = vector.extract_strided_slice %4 {offsets = [0, 5], sizes = [8, 1], strides = [1, 1]} : vector<8x8xf32> to vector<8x1xf32>
    %21 = vector.shape_cast %20 : vector<8x1xf32> to vector<8x1xf32>
    %22 = vector.broadcast %21 : vector<8x1xf32> to vector<8x256xf32>
    %cst_6 = arith.constant 0.000000e+00 : f32
    %23 = vector.broadcast %cst_6 : f32 to vector<8x256xf32>
    %24 = vector.extract_strided_slice %10 {offsets = [0, 0], sizes = [8, 256], strides = [1, 1]} : vector<8x1280xf32> to vector<8x256xf32>
    %25 = arith.negf %24 : vector<8x256xf32>
    %26 = math.exp %25 : vector<8x256xf32>
    %cst_7 = arith.constant 1.000000e+00 : f32
    %27 = vector.broadcast %cst_7 : f32 to vector<8x256xf32>
    %28 = arith.addf %27, %26 : vector<8x256xf32>
    %29 = arith.divf %27, %28 : vector<8x256xf32>
    %30 = arith.mulf %13, %23 : vector<8x256xf32>
    %31 = arith.mulf %19, %29 : vector<8x256xf32>
    %32 = arith.addf %16, %31 : vector<8x256xf32>
    %33 = arith.divf %30, %32 : vector<8x256xf32>
    %34 = arith.mulf %24, %22 : vector<8x256xf32>
    %35 = arith.addf %33, %34 : vector<8x256xf32>
    %36 = arith.negf %35 : vector<8x256xf32>
    %37 = math.exp %36 : vector<8x256xf32>
    %cst_8 = arith.constant 1.000000e+00 : f32
    %38 = vector.broadcast %cst_8 : f32 to vector<8x256xf32>
    %39 = arith.addf %38, %37 : vector<8x256xf32>
    %40 = arith.divf %38, %39 : vector<8x256xf32>
    %41 = vector.extract_strided_slice %10 {offsets = [0, 256], sizes = [8, 256], strides = [1, 1]} : vector<8x1280xf32> to vector<8x256xf32>
    %42 = arith.negf %41 : vector<8x256xf32>
    %43 = math.exp %42 : vector<8x256xf32>
    %cst_9 = arith.constant 1.000000e+00 : f32
    %44 = vector.broadcast %cst_9 : f32 to vector<8x256xf32>
    %45 = arith.addf %44, %43 : vector<8x256xf32>
    %46 = arith.divf %44, %45 : vector<8x256xf32>
    %47 = arith.mulf %13, %40 : vector<8x256xf32>
    %48 = arith.mulf %19, %46 : vector<8x256xf32>
    %49 = arith.addf %16, %48 : vector<8x256xf32>
    %50 = arith.divf %47, %49 : vector<8x256xf32>
    %51 = arith.mulf %41, %22 : vector<8x256xf32>
    %52 = arith.addf %50, %51 : vector<8x256xf32>
    %53 = arith.negf %52 : vector<8x256xf32>
    %54 = math.exp %53 : vector<8x256xf32>
    %cst_10 = arith.constant 1.000000e+00 : f32
    %55 = vector.broadcast %cst_10 : f32 to vector<8x256xf32>
    %56 = arith.addf %55, %54 : vector<8x256xf32>
    %57 = arith.divf %55, %56 : vector<8x256xf32>
    %58 = vector.extract_strided_slice %10 {offsets = [0, 512], sizes = [8, 256], strides = [1, 1]} : vector<8x1280xf32> to vector<8x256xf32>
    %59 = arith.negf %58 : vector<8x256xf32>
    %60 = math.exp %59 : vector<8x256xf32>
    %cst_11 = arith.constant 1.000000e+00 : f32
    %61 = vector.broadcast %cst_11 : f32 to vector<8x256xf32>
    %62 = arith.addf %61, %60 : vector<8x256xf32>
    %63 = arith.divf %61, %62 : vector<8x256xf32>
    %64 = arith.mulf %13, %57 : vector<8x256xf32>
    %65 = arith.mulf %19, %63 : vector<8x256xf32>
    %66 = arith.addf %16, %65 : vector<8x256xf32>
    %67 = arith.divf %64, %66 : vector<8x256xf32>
    %68 = arith.mulf %58, %22 : vector<8x256xf32>
    %69 = arith.addf %67, %68 : vector<8x256xf32>
    %70 = arith.negf %69 : vector<8x256xf32>
    %71 = math.exp %70 : vector<8x256xf32>
    %cst_12 = arith.constant 1.000000e+00 : f32
    %72 = vector.broadcast %cst_12 : f32 to vector<8x256xf32>
    %73 = arith.addf %72, %71 : vector<8x256xf32>
    %74 = arith.divf %72, %73 : vector<8x256xf32>
    %75 = vector.extract_strided_slice %10 {offsets = [0, 768], sizes = [8, 256], strides = [1, 1]} : vector<8x1280xf32> to vector<8x256xf32>
    %76 = arith.negf %75 : vector<8x256xf32>
    %77 = math.exp %76 : vector<8x256xf32>
    %cst_13 = arith.constant 1.000000e+00 : f32
    %78 = vector.broadcast %cst_13 : f32 to vector<8x256xf32>
    %79 = arith.addf %78, %77 : vector<8x256xf32>
    %80 = arith.divf %78, %79 : vector<8x256xf32>
    %81 = arith.mulf %13, %74 : vector<8x256xf32>
    %82 = arith.mulf %19, %80 : vector<8x256xf32>
    %83 = arith.addf %16, %82 : vector<8x256xf32>
    %84 = arith.divf %81, %83 : vector<8x256xf32>
    %85 = arith.mulf %75, %22 : vector<8x256xf32>
    %86 = arith.addf %84, %85 : vector<8x256xf32>
    %87 = arith.negf %86 : vector<8x256xf32>
    %88 = math.exp %87 : vector<8x256xf32>
    %cst_14 = arith.constant 1.000000e+00 : f32
    %89 = vector.broadcast %cst_14 : f32 to vector<8x256xf32>
    %90 = arith.addf %89, %88 : vector<8x256xf32>
    %91 = arith.divf %89, %90 : vector<8x256xf32>
    %92 = vector.extract_strided_slice %10 {offsets = [0, 1024], sizes = [8, 256], strides = [1, 1]} : vector<8x1280xf32> to vector<8x256xf32>
    %93 = arith.negf %92 : vector<8x256xf32>
    %94 = math.exp %93 : vector<8x256xf32>
    %cst_15 = arith.constant 1.000000e+00 : f32
    %95 = vector.broadcast %cst_15 : f32 to vector<8x256xf32>
    %96 = arith.addf %95, %94 : vector<8x256xf32>
    %97 = arith.divf %95, %96 : vector<8x256xf32>
    %98 = arith.mulf %13, %91 : vector<8x256xf32>
    %99 = arith.mulf %19, %97 : vector<8x256xf32>
    %100 = arith.addf %16, %99 : vector<8x256xf32>
    %101 = arith.divf %98, %100 : vector<8x256xf32>
    %102 = arith.mulf %92, %22 : vector<8x256xf32>
    %103 = arith.addf %101, %102 : vector<8x256xf32>
    %104 = arith.negf %103 : vector<8x256xf32>
    %105 = math.exp %104 : vector<8x256xf32>
    %cst_16 = arith.constant 1.000000e+00 : f32
    %106 = vector.broadcast %cst_16 : f32 to vector<8x256xf32>
    %107 = arith.addf %106, %105 : vector<8x256xf32>
    %108 = arith.divf %106, %107 : vector<8x256xf32>
    %c0_17 = arith.constant 0 : index
    %c0_18 = arith.constant 0 : index
    %109 = vector.load %arg4[%c0_17, %c0_18] : memref<8x256xf32, #tpu.memory_space<vmem>>, vector<8x256xf32>
    %110 = arith.mulf %108, %109 : vector<8x256xf32>
    %cst_19 = arith.constant dense<0.000000e+00> : vector<8xf32>
    %111 = vector.multi_reduction <add>, %110, %cst_19 [1] : vector<8x256xf32> to vector<8xf32>
    %112 = vector.shape_cast %111 : vector<8xf32> to vector<8x1xf32>
    %cst_20 = arith.constant dense<0.000000e+00> : vector<1xf32>
    %113 = vector.multi_reduction <add>, %112, %cst_20 [0] : vector<8x1xf32> to vector<1xf32>
    %114 = vector.shape_cast %113 : vector<1xf32> to vector<1x1xf32>
    %c0_21 = arith.constant 0 : index
    %c0_22 = arith.constant 0 : index
    %115 = vector.load %arg5[%c0_21, %c0_22] : memref<1x1xf32, #tpu.memory_space<vmem>>, vector<1x1xf32>
    %116 = arith.addf %114, %115 : vector<1x1xf32>
    %117 = arith.negf %116 : vector<1x1xf32>
    %118 = math.exp %117 : vector<1x1xf32>
    %cst_23 = arith.constant 1.000000e+00 : f32
    %119 = vector.broadcast %cst_23 : f32 to vector<1x1xf32>
    %120 = arith.addf %119, %118 : vector<1x1xf32>
    %121 = arith.divf %119, %120 : vector<1x1xf32>
    %c0_24 = arith.constant 0 : index
    %c0_25 = arith.constant 0 : index
    %c0_26 = arith.constant 0 : index
    %122 = vector.load %arg6[%c0_24, %c0_25, %c0_26] : memref<1x1x1xf32, #tpu.memory_space<vmem>>, vector<1x1x1xf32>
    %123 = vector.shape_cast %122 : vector<1x1x1xf32> to vector<1x1xf32>
    %124 = vector.shape_cast %121 : vector<1x1xf32> to vector<1x1x1xf32>
    tpu.vector_store %arg6[%c0_24, %c0_25, %c0_26], %124 {strides = array<i32>} : memref<1x1x1xf32, #tpu.memory_space<vmem>>, vector<1x1x1xf32>,
    return
  }
  func.func @transform_0(%arg0: i32) -> (i32, i32, i32) {
    %c0_i32 = arith.constant 0 : i32
    %c0_i32_0 = arith.constant 0 : i32
    %c0_i32_1 = arith.constant 0 : i32
    return %arg0, %c0_i32, %c0_i32_0 : i32, i32, i32
  }
  func.func @transform_1(%arg0: i32) -> (i32, i32) {
    %c0_i32 = arith.constant 0 : i32
    %c0_i32_0 = arith.constant 0 : i32
    %c0_i32_1 = arith.constant 0 : i32
    return %c0_i32, %c0_i32_0 : i32, i32
  }
  func.func @transform_2(%arg0: i32) -> (i32, i32) {
    %c0_i32 = arith.constant 0 : i32
    %c0_i32_0 = arith.constant 0 : i32
    %c0_i32_1 = arith.constant 0 : i32
    return %c0_i32, %c0_i32_0 : i32, i32
  }
  func.func @transform_3(%arg0: i32) -> (i32, i32) {
    %c0_i32 = arith.constant 0 : i32
    %c0_i32_0 = arith.constant 0 : i32
    %c0_i32_1 = arith.constant 0 : i32
    return %c0_i32, %c0_i32_0 : i32, i32
  }
  func.func @transform_4(%arg0: i32) -> (i32, i32) {
    %c0_i32 = arith.constant 0 : i32
    %c0_i32_0 = arith.constant 0 : i32
    %c0_i32_1 = arith.constant 0 : i32
    return %c0_i32, %c0_i32_0 : i32, i32
  }
  func.func @transform_5(%arg0: i32) -> (i32, i32, i32) {
    %c0_i32 = arith.constant 0 : i32
    %c0_i32_0 = arith.constant 0 : i32
    %c0_i32_1 = arith.constant 0 : i32
    return %arg0, %c0_i32, %c0_i32_0 : i32, i32, i32
  }
}

</mosaic_0001>

<llo_original>
// kernel: spikefpn_ncars_forward.1
$region0: #{spikefpn_ncars_forward.1}
  #allocation0 [shape = 'u32[]', space=smem, size = 0x4, offset = 0x4, fixed_abs, tag = 'smem constant byte address 0x4 - core index']
  #allocation1 [shape = 'u32[144,128]{1,0:T(1,128)}', space=vmem, size = 0x12000, scoped, tag = 'internal scratch']
  #allocation2 [shape = 'f32[1,1]{1,0:T(1,128)S(1)}', space=vmem, size = 0x200, scoped, tag = 'scoped memory for spikefpn_ncars_forward.1']
  %s0 = inlined_call_operand.vmem [shape: bf16[2,48,1280], index: 0, kind: input, shape index: {}]
  %s1 = inlined_call_operand.vmem [shape: bf16[8,48], index: 1, kind: input, shape index: {}]
  %s2 = inlined_call_operand.vmem [shape: f32[8,8], index: 2, kind: input, shape index: {}]
  %s3 = inlined_call_operand.vmem [shape: f32[8,256], index: 3, kind: input, shape index: {}]
  %s4 = inlined_call_operand.<no memory space> [shape: f32[1,1], index: 4, kind: input, shape index: {}]
  %s5 = inlined_call_operand.vmem [shape: f32[2,1,1], index: 5, kind: output, shape index: {}]
  %s6 = sld [smem:[#allocation0]]
  $region53: #{spikefpn_ncars_forward.1} parent=0
    _
  %s8 = ssub.s32 1, %s6
  %s9 = scalar_select 0, %s8, %s6
  %v10 = vstv %s4
  %11 = vst [vmem:[#allocation2] sm:$0x1] %v10
  loop: start=0, step=1, limit=4
  $region2: #{spikefpn_ncars_forward.1} parent=0 // loop_pre_header
    _
  $region3: #{spikefpn_ncars_forward.1} parent=0 // loop_header
    %s13 = sphi 0, %s17
    %p14 = scmp.ge.s32.totalorder %s13, 4
    %s23 = sphi 0, %s25
    %s26 = sphi 0, %s23
    %s27 = sphi 0, %s26
    %s43 = sphi 0, %s27
    %s47 = sphi 0, %s47
    %s49 = sphi 0, %s47
    %s50 = sphi 0, %s49
    %s64 = sphi 0, %s50
    %s68 = sphi 0, %s68
    %s70 = sphi 0, %s68
    %s71 = sphi 0, %s70
    %s85 = sphi 0, %s71
    %s89 = sphi 0, %s89
    %s91 = sphi 0, %s89
    %s92 = sphi 0, %s91
    %s106 = sphi 0, %s92
    %s110 = sphi 0, %s110
    %s112 = sphi 0, %s110
    %s113 = sphi 0, %s112
    %s127 = sphi 0, %s113
    %s133 = sphi 0, %s135
    %s136 = sphi 0, %s133
    %s137 = sphi 0, %s136
    %s153 = sphi 0, %s137
  $region4: #{spikefpn_ncars_forward.1} parent=0 // loop_header_branch
    %16 = sbr.rel (%p14) target = $region8
  $region5: #{spikefpn_ncars_forward.1} parent=0 // loop_body
    %s18 = ssub.s32 %s13, 1
    %s19 = ssub.s32 %s13, 2
    %s20 = sadd.s32 %s13, 1
    %s21 = ssub.s32 %s13, %s20
    %p22 = scmp.eq.s32.totalorder %s21, 0
    %s24 = sadd.s32 %s23, 1
    %s25 = scalar_select %p22, %s23, %s24
    %p28 = pneg %p22
    %p29 = scmp.eq.s32.totalorder %s13, 1
    %p30 = por %p28, %p29
    %p31 = scmp.ne.s32.totalorder %s23, %s26
    %p32 = scmp.eq.s32.totalorder %s13, 0
    %p33 = por %p31, %p32
    %p34 = scmp.ne.s32.totalorder %s23, %s26
    %p35 = scmp.eq.s32.totalorder %s18, 1
    %p36 = por %p34, %p35
    %p37 = scmp.ne.s32.totalorder %s26, %s27
    %p38 = scmp.eq.s32.totalorder %s18, 0
    %p39 = por %p37, %p38
    %p40 = scmp.ne.s32.totalorder %s26, %s27
    %p41 = scmp.eq.s32.totalorder %s19, 1
    %p42 = por %p40, %p41
    %p44 = scmp.ne.s32.totalorder %s27, %s43
    %p45 = scmp.eq.s32.totalorder %s19, 0
    %p46 = por %p44, %p45
    %s48 = sadd.s32 %s47, 1
    %p51 = scmp.eq.s32.totalorder %s13, 1
    %p52 = scmp.ne.s32.totalorder %s47, %s49
    %p53 = scmp.eq.s32.totalorder %s13, 0
    %p54 = por %p52, %p53
    %p55 = scmp.ne.s32.totalorder %s47, %s49
    %p56 = scmp.eq.s32.totalorder %s18, 1
    %p57 = por %p55, %p56
    %p58 = scmp.ne.s32.totalorder %s49, %s50
    %p59 = scmp.eq.s32.totalorder %s18, 0
    %p60 = por %p58, %p59
    %p61 = scmp.ne.s32.totalorder %s49, %s50
    %p62 = scmp.eq.s32.totalorder %s19, 1
    %p63 = por %p61, %p62
    %p65 = scmp.ne.s32.totalorder %s50, %s64
    %p66 = scmp.eq.s32.totalorder %s19, 0
    %p67 = por %p65, %p66
    %s69 = sadd.s32 %s68, 1
    %p72 = scmp.eq.s32.totalorder %s13, 1
    %p73 = scmp.ne.s32.totalorder %s68, %s70
    %p74 = scmp.eq.s32.totalorder %s13, 0
    %p75 = por %p73, %p74
    %p76 = scmp.ne.s32.totalorder %s68, %s70
    %p77 = scmp.eq.s32.totalorder %s18, 1
    %p78 = por %p76, %p77
    %p79 = scmp.ne.s32.totalorder %s70, %s71
    %p80 = scmp.eq.s32.totalorder %s18, 0
    %p81 = por %p79, %p80
    %p82 = scmp.ne.s32.totalorder %s70, %s71
    %p83 = scmp.eq.s32.totalorder %s19, 1
    %p84 = por %p82, %p83
    %p86 = scmp.ne.s32.totalorder %s71, %s85
    %p87 = scmp.eq.s32.totalorder %s19, 0
    %p88 = por %p86, %p87
    %s90 = sadd.s32 %s89, 1
    %p93 = scmp.eq.s32.totalorder %s13, 1
    %p94 = scmp.ne.s32.totalorder %s89, %s91
    %p95 = scmp.eq.s32.totalorder %s13, 0
    %p96 = por %p94, %p95
    %p97 = scmp.ne.s32.totalorder %s89, %s91
    %p98 = scmp.eq.s32.totalorder %s18, 1
    %p99 = por %p97, %p98
    %p100 = scmp.ne.s32.totalorder %s91, %s92
    %p101 = scmp.eq.s32.totalorder %s18, 0
    %p102 = por %p100, %p101
    %p103 = scmp.ne.s32.totalorder %s91, %s92
    %p104 = scmp.eq.s32.totalorder %s19, 1
    %p105 = por %p103, %p104
    %p107 = scmp.ne.s32.totalorder %s92, %s106
    %p108 = scmp.eq.s32.totalorder %s19, 0
    %p109 = por %p107, %p108
    %s111 = sadd.s32 %s110, 1
    %p114 = scmp.eq.s32.totalorder %s13, 1
    %p115 = scmp.ne.s32.totalorder %s110, %s112
    %p116 = scmp.eq.s32.totalorder %s13, 0
    %p117 = por %p115, %p116
    %p118 = scmp.ne.s32.totalorder %s110, %s112
    %p119 = scmp.eq.s32.totalorder %s18, 1
    %p120 = por %p118, %p119
    %p121 = scmp.ne.s32.totalorder %s112, %s113
    %p122 = scmp.eq.s32.totalorder %s18, 0
    %p123 = por %p121, %p122
    %p124 = scmp.ne.s32.totalorder %s112, %s113
    %p125 = scmp.eq.s32.totalorder %s19, 1
    %p126 = por %p124, %p125
    %p128 = scmp.ne.s32.totalorder %s113, %s127
    %p129 = scmp.eq.s32.totalorder %s19, 0
    %p130 = por %p128, %p129
    %s131 = ssub.s32 %s13, %s20
    %p132 = scmp.eq.s32.totalorder %s131, 0
    %s134 = sadd.s32 %s133, 1
    %s135 = scalar_select %p132, %s133, %s134
    %p138 = pneg %p132
    %p139 = scmp.eq.s32.totalorder %s13, 1
    %p140 = por %p138, %p139
    %p141 = scmp.ne.s32.totalorder %s133, %s136
    %p142 = scmp.eq.s32.totalorder %s13, 0
    %p143 = por %p141, %p142
    %p144 = scmp.ne.s32.totalorder %s133, %s136
    %p145 = scmp.eq.s32.totalorder %s18, 1
    %p146 = por %p144, %p145
    %p147 = scmp.ne.s32.totalorder %s136, %s137
    %p148 = scmp.eq.s32.totalorder %s18, 0
    %p149 = por %p147, %p148
    %p150 = scmp.ne.s32.totalorder %s136, %s137
    %p151 = scmp.eq.s32.totalorder %s19, 1
    %p152 = por %p150, %p151
    %p154 = scmp.ne.s32.totalorder %s137, %s153
    %p155 = scmp.eq.s32.totalorder %s19, 0
    %p156 = por %p154, %p155
    %p157 = scmp.le.s32.totalorder 1, %s13
    %p158 = scmp.lt.s32.totalorder %s13, 3
    %p159 = pnand %p157, %p158
    %p160 = pneg %p159
    // Predicated region
    $region9: #{spikefpn_ncars_forward.1} parent=5 // pred_check
      _
    $region10: #{spikefpn_ncars_forward.1} parent=5 // pred_check_branch
      %162 = sbr.rel (%p159) target = $region12
    $region11: #{spikefpn_ncars_forward.1} parent=5 // pred_region
      %s163 = ssub.s32 %s13, 1
      // Predicated region
      $region13: #{spikefpn_ncars_forward.1} parent=11 // pred_check
        %p164 = pneg %p60
      $region14: #{spikefpn_ncars_forward.1} parent=11 // pred_check_branch
        %166 = sbr.rel (%p164) target = $region16
      $region15: #{spikefpn_ncars_forward.1} parent=11 // pred_region
        _
      $region16: #{spikefpn_ncars_forward.1} parent=11 // pred_fallthru
        _
      // Predicated region
      $region17: #{spikefpn_ncars_forward.1} parent=11 // pred_check
        %p167 = pneg %p81
      $region18: #{spikefpn_ncars_forward.1} parent=11 // pred_check_branch
        %169 = sbr.rel (%p167) target = $region20
      $region19: #{spikefpn_ncars_forward.1} parent=11 // pred_region
        _
      $region20: #{spikefpn_ncars_forward.1} parent=11 // pred_fallthru
        _
      // Predicated region
      $region21: #{spikefpn_ncars_forward.1} parent=11 // pred_check
        %p170 = pneg %p102
      $region22: #{spikefpn_ncars_forward.1} parent=11 // pred_check_branch
        %172 = sbr.rel (%p170) target = $region24
      $region23: #{spikefpn_ncars_forward.1} parent=11 // pred_region
        _
      $region24: #{spikefpn_ncars_forward.1} parent=11 // pred_fallthru
        _
      // Predicated region
      $region25: #{spikefpn_ncars_forward.1} parent=11 // pred_check
        %p173 = pneg %p123
      $region26: #{spikefpn_ncars_forward.1} parent=11 // pred_check_branch
        %175 = sbr.rel (%p173) target = $region28
      $region27: #{spikefpn_ncars_forward.1} parent=11 // pred_region
        _
      $region28: #{spikefpn_ncars_forward.1} parent=11 // pred_fallthru
        _
    $region12: #{spikefpn_ncars_forward.1} parent=5 // pred_fallthru
      _
    %p176 = scmp.lt.s32.totalorder %s13, 2
    // Predicated region
    $region29: #{spikefpn_ncars_forward.1} parent=5 // pred_check
      %p177 = pneg %p176
    $region30: #{spikefpn_ncars_forward.1} parent=5 // pred_check_branch
      %179 = sbr.rel (%p177) target = $region32
    $region31: #{spikefpn_ncars_forward.1} parent=5 // pred_region
      // Predicated region
      $region33: #{spikefpn_ncars_forward.1} parent=31 // pred_check
        %p180 = pneg %p33
      $region34: #{spikefpn_ncars_forward.1} parent=31 // pred_check_branch
        %182 = sbr.rel (%p180) target = $region36
      $region35: #{spikefpn_ncars_forward.1} parent=31 // pred_region
        %p183 = scmp.lt.s32.totalorder %s13, 1
        %s184 = scalar_select %p183, %s13, 1
        %s185 = smul.addr %s184, 60
        %s186 = smul.addr %s185, 4
        %s187 = scalar_lea.vmem %s0, %s186
      $region36: #{spikefpn_ncars_forward.1} parent=31 // pred_fallthru
        _
    $region32: #{spikefpn_ncars_forward.1} parent=5 // pred_fallthru
      _
    %p188 = scmp.le.s32.totalorder 1, %s13
    %p189 = scmp.lt.s32.totalorder %s13, 3
    %p190 = pnand %p188, %p189
    %p191 = pneg %p190
    // Predicated region
    $region37: #{spikefpn_ncars_forward.1} parent=5 // pred_check
      _
    $region38: #{spikefpn_ncars_forward.1} parent=5 // pred_check_branch
      %193 = sbr.rel (%p190) target = $region40
    $region39: #{spikefpn_ncars_forward.1} parent=5 // pred_region
      %s194 = ssub.s32 %s13, 1
      %p195 = scmp.lt.s32.totalorder %s18, 1
      %s196 = scalar_select %p195, %s18, 1
      %s197 = smul.addr %s196, 60
      %s198 = smul.addr %s197, 4
      %s199 = scalar_lea.vmem %s0, %s198
      %p200 = pneg %p39
      %p201 = pneg %p36
      %p202 = pneg %p60
      %p203 = pneg %p57
      %p204 = pneg %p81
      %p205 = pneg %p78
      %p206 = pneg %p102
      %p207 = pneg %p99
      %p208 = pneg %p123
      %p209 = pneg %p120
      %p210 = pneg %p149
      %p211 = pneg %p146
      %p212 = scmp.lt.s32.totalorder %s18, 1
      %s213 = scalar_select %p212, %s18, 1
      %s214 = scalar_lea.vmem %s5, %s213
      %p215 = scmp.lt.s32.totalorder %s18, 1
      %s216 = scalar_select %p215, %s18, 1
      %s217 = smul.addr %s216, 60
      %s218 = smul.addr %s217, 4
      %s219 = scalar_lea.vmem %s0, %s218
      %p220 = scmp.lt.s32.totalorder %s18, 1
      %s221 = scalar_select %p220, %s18, 1
      %s222 = scalar_lea.vmem %s5, %s221
      %v224 = vld [vmem:[%s1] sm:$0xf]
      %v225 = vld [vmem:[%s219] sm:$0xff]
      %v226 = vld [vmem:[%s219 + $0x8] sm:$0xff]
      %v227 = vld [vmem:[%s219 + $0x10] sm:$0xff]
      %v228 = vld [vmem:[%s219 + $0x18] sm:$0xff]
      %v229 = vld [vmem:[%s219 + $0x20] sm:$0xff]
      %v230 = vld [vmem:[%s219 + $0x28] sm:$0xff]
      %v231 = vld [vmem:[%s219 + $0x30] sm:$0xff]
      %v232 = vld [vmem:[%s219 + $0x38] sm:$0xff]
      %v233 = vld [vmem:[%s219 + $0x40] sm:$0xff]
      %v234 = vld [vmem:[%s219 + $0x48] sm:$0xff]
      %v235 = vld [vmem:[%s219 + $0x50] sm:$0xff]
      %v236 = vld [vmem:[%s219 + $0x58] sm:$0xff]
      %v237 = vld [vmem:[%s219 + $0x60] sm:$0xff]
      %v238 = vld [vmem:[%s219 + $0x68] sm:$0xff]
      %v239 = vld [vmem:[%s219 + $0x70] sm:$0xff]
      %v240 = vld [vmem:[%s219 + $0x78] sm:$0xff]
      %v241 = vld [vmem:[%s219 + $0x80] sm:$0xff]
      %v242 = vld [vmem:[%s219 + $0x88] sm:$0xff]
      %v243 = vld [vmem:[%s219 + $0x90] sm:$0xff]
      %v244 = vld [vmem:[%s219 + $0x98] sm:$0xff]
      %v245 = vld [vmem:[%s219 + $0xa0] sm:$0xff]
      %v246 = vld [vmem:[%s219 + $0xa8] sm:$0xff]
      %v247 = vld [vmem:[%s219 + $0xb0] sm:$0xff]
      %v248 = vld [vmem:[%s219 + $0xb8] sm:$0xff]
      %v249 = vld [vmem:[%s219 + $0xc0] sm:$0xff]
      %v250 = vld [vmem:[%s219 + $0xc8] sm:$0xff]
      %v251 = vld [vmem:[%s219 + $0xd0] sm:$0xff]
      %v252 = vld [vmem:[%s219 + $0xd8] sm:$0xff]
      %v253 = vld [vmem:[%s219 + $0xe0] sm:$0xff]
      %v254 = vld [vmem:[%s219 + $0xe8] sm:$0xff]
      %v285 = vunpack.c.l.b16 %v225
      %v286 = vunpack.c.h.b16 %v225
      %v287 = vunpack.c.l.b16 %v226
      %v288 = vunpack.c.h.b16 %v226
      %v289 = vunpack.c.l.b16 %v227
      %v290 = vunpack.c.h.b16 %v227
      %v291 = vunpack.c.l.b16 %v228
      %v292 = vunpack.c.h.b16 %v228
      %v293 = vunpack.c.l.b16 %v229
      %v294 = vunpack.c.h.b16 %v229
      %v295 = vunpack.c.l.b16 %v230
      %v296 = vunpack.c.h.b16 %v230
      %v297 = vunpack.c.l.b16 %v231
      %v298 = vunpack.c.h.b16 %v231
      %v299 = vunpack.c.l.b16 %v232
      %v300 = vunpack.c.h.b16 %v232
      %v301 = vunpack.c.l.b16 %v233
      %v302 = vunpack.c.h.b16 %v233
      %v303 = vunpack.c.l.b16 %v234
      %v304 = vunpack.c.h.b16 %v234
      %v305 = vunpack.c.l.b16 %v235
      %v306 = vunpack.c.h.b16 %v235
      %v307 = vunpack.c.l.b16 %v236
      %v308 = vunpack.c.h.b16 %v236
      %v309 = vunpack.c.l.b16 %v237
      %v310 = vunpack.c.h.b16 %v237
      %v311 = vunpack.c.l.b16 %v238
      %v312 = vunpack.c.h.b16 %v238
      %v313 = vunpack.c.l.b16 %v239
      %v314 = vunpack.c.h.b16 %v239
      %v315 = vunpack.c.l.b16 %v240
      %v316 = vunpack.c.h.b16 %v240
      %v317 = vunpack.c.l.b16 %v241
      %v318 = vunpack.c.h.b16 %v241
      %v319 = vunpack.c.l.b16 %v242
      %v320 = vunpack.c.h.b16 %v242
      %v321 = vunpack.c.l.b16 %v243
      %v322 = vunpack.c.h.b16 %v243
      %v323 = vunpack.c.l.b16 %v244
      %v324 = vunpack.c.h.b16 %v244
      %v325 = vunpack.c.l.b16 %v245
      %v326 = vunpack.c.h.b16 %v245
      %v327 = vunpack.c.l.b16 %v246
      %v328 = vunpack.c.h.b16 %v246
      %v329 = vunpack.c.l.b16 %v247
      %v330 = vunpack.c.h.b16 %v247
      %v331 = vunpack.c.l.b16 %v248
      %v332 = vunpack.c.h.b16 %v248
      %v333 = vunpack.c.l.b16 %v249
      %v334 = vunpack.c.h.b16 %v249
      %v335 = vunpack.c.l.b16 %v250
      %v336 = vunpack.c.h.b16 %v250
      %v337 = vunpack.c.l.b16 %v251
      %v338 = vunpack.c.h.b16 %v251
      %v339 = vunpack.c.l.b16 %v252
      %v340 = vunpack.c.h.b16 %v252
      %v341 = vunpack.c.l.b16 %v253
      %v342 = vunpack.c.h.b16 %v253
      %v343 = vunpack.c.l.b16 %v254
      %v344 = vunpack.c.h.b16 %v254
      %v345 = vpack.c.b16 %v295, %v285
      %v346 = vpack.c.b16 %v296, %v286
      %v347 = vpack.c.b16 %v297, %v287
      %v348 = vpack.c.b16 %v298, %v288
      %v349 = vpack.c.b16 %v299, %v289
      %v350 = vpack.c.b16 %v300, %v290
      %v351 = vpack.c.b16 %v301, %v291
      %v352 = vpack.c.b16 %v302, %v292
      %v353 = vpack.c.b16 %v303, %v293
      %v354 = vpack.c.b16 %v304, %v294
      %v355 = vpack.c.b16 %v315, %v305
      %v356 = vpack.c.b16 %v316, %v306
      %v357 = vpack.c.b16 %v317, %v307
      %v358 = vpack.c.b16 %v318, %v308
      %v359 = vpack.c.b16 %v319, %v309
      %v360 = vpack.c.b16 %v320, %v310
      %v361 = vpack.c.b16 %v321, %v311
      %v362 = vpack.c.b16 %v322, %v312
      %v363 = vpack.c.b16 %v323, %v313
      %v364 = vpack.c.b16 %v324, %v314
      %v365 = vpack.c.b16 %v335, %v325
      %v366 = vpack.c.b16 %v336, %v326
      %v367 = vpack.c.b16 %v337, %v327
      %v368 = vpack.c.b16 %v338, %v328
      %v369 = vpack.c.b16 %v339, %v329
      %v370 = vpack.c.b16 %v340, %v330
      %v371 = vpack.c.b16 %v341, %v331
      %v372 = vpack.c.b16 %v342, %v332
      %v373 = vpack.c.b16 %v343, %v333
      %v374 = vpack.c.b16 %v344, %v334
      %vm405 = vcmask 392192
      %v407 = vsel %vm405, %v224, 0
      %409 = vmatprep.subr.bf16.mxu0 %v346
      %410 = vmatpush1.bf16.msra.mxu0 %v345
      %411 = vmatprep.subr.bf16.mxu0 %v356
      %412 = vmatpush1.bf16.msra.mxu0 %v355
      %413 = vmatprep.subr.bf16.mxu0 %v366
      %414 = vmatpush1.bf16.msra.mxu0 %v365
      %415 = vmatprep.subr.bf16.mxu0 0
      %416 = vmatpush1.bf16.msra.mxu0 0
      %417 = vmatprep.subr.bf16.mxu0 0
      %418 = vmatpush1.bf16.msra.mxu0 0
      %419 = vmatprep.subr.bf16.mxu0 0
      %420 = vmatpush1.bf16.msra.mxu0 0
      %421 = vmatprep.subr.bf16.mxu0 0
      %422 = vmatpush1.bf16.msra.mxu0 0
      %423 = vmatprep.subr.bf16.mxu0 0
      %424 = vmatpush1.bf16.msra.mxu0 0
      %425 = vmatprep.subr.bf16.mxu0 0
      %426 = vmatpush1.bf16.msra.mxu0 0
      %427 = vmatprep.subr.bf16.mxu0 0
      %428 = vmatpush1.bf16.msra.mxu0 0
      %429 = vmatprep.subr.bf16.mxu0 0
      %430 = vmatpush1.bf16.msra.mxu0 0
      %431 = vmatprep.subr.bf16.mxu0 0
      %432 = vmatpush1.bf16.msra.mxu0 0
      %433 = vmatprep.subr.bf16.mxu0 0
      %434 = vmatpush1.bf16.msra.mxu0 0
      %435 = vmatprep.subr.bf16.mxu0 0
      %436 = vmatpush1.bf16.msra.mxu0 0
      %437 = vmatprep.subr.bf16.mxu0 0
      %438 = vmatpush1.bf16.msra.mxu0 0
      %439 = vmatprep.subr.bf16.mxu0 0
      %440 = vmatpush1.bf16.msra.mxu0 0
      %441 = vmatprep.mubr.bf16.mxu0 0
      %442 = vmatmul.mubr.bf16.gmra.mrb[0].mxu0 %v407
      %v443 = vpop.f32.mrb[0].mxu0
      %v444 = vadd.f32 0.0, %v443
      %v445 = vpop.f32.mrb[0].mxu0
      %v446 = vadd.f32 0.0, %v445
      %v447 = vpop.f32.mrb[0].mxu0
      %v448 = vpop.f32.mrb[0].mxu0
      %449 = vdwg.mxu0
      %450 = vmatprep.subr.bf16.mxu0 %v348
      %451 = vmatpush1.bf16.msra.mxu0 %v347
      %452 = vmatprep.subr.bf16.mxu0 %v358
      %453 = vmatpush1.bf16.msra.mxu0 %v357
      %454 = vmatprep.subr.bf16.mxu0 %v368
      %455 = vmatpush1.bf16.msra.mxu0 %v367
      %456 = vmatprep.subr.bf16.mxu0 0
      %457 = vmatpush1.bf16.msra.mxu0 0
      %458 = vmatprep.subr.bf16.mxu0 0
      %459 = vmatpush1.bf16.msra.mxu0 0
      %460 = vmatprep.subr.bf16.mxu0 0
      %461 = vmatpush1.bf16.msra.mxu0 0
      %462 = vmatprep.subr.bf16.mxu0 0
      %463 = vmatpush1.bf16.msra.mxu0 0
      %464 = vmatprep.subr.bf16.mxu0 0
      %465 = vmatpush1.bf16.msra.mxu0 0
      %466 = vmatprep.subr.bf16.mxu0 0
      %467 = vmatpush1.bf16.msra.mxu0 0
      %468 = vmatprep.subr.bf16.mxu0 0
      %469 = vmatpush1.bf16.msra.mxu0 0
      %470 = vmatprep.subr.bf16.mxu0 0
      %471 = vmatpush1.bf16.msra.mxu0 0
      %472 = vmatprep.subr.bf16.mxu0 0
      %473 = vmatpush1.bf16.msra.mxu0 0
      %474 = vmatprep.subr.bf16.mxu0 0
      %475 = vmatpush1.bf16.msra.mxu0 0
      %476 = vmatprep.subr.bf16.mxu0 0
      %477 = vmatpush1.bf16.msra.mxu0 0
      %478 = vmatprep.subr.bf16.mxu0 0
      %479 = vmatpush1.bf16.msra.mxu0 0
      %480 = vmatprep.subr.bf16.mxu0 0
      %481 = vmatpush1.bf16.msra.mxu0 0
      %482 = vmatprep.mubr.bf16.mxu0 0
      %483 = vmatmul.mubr.bf16.gmra.mrb[0].mxu0 %v407
      %v484 = vpop.f32.mrb[0].mxu0
      %v485 = vadd.f32 0.0, %v484
      %v486 = vpop.f32.mrb[0].mxu0
      %v487 = vadd.f32 0.0, %v486
      %v488 = vpop.f32.mrb[0].mxu0
      %v489 = vpop.f32.mrb[0].mxu0
      %490 = vdwg.mxu0
      %491 = vmatprep.subr.bf16.mxu0 %v350
      %492 = vmatpush1.bf16.msra.mxu0 %v349
      %493 = vmatprep.subr.bf16.mxu0 %v360
      %494 = vmatpush1.bf16.msra.mxu0 %v359
      %495 = vmatprep.subr.bf16.mxu0 %v370
      %496 = vmatpush1.bf16.msra.mxu0 %v369
      %497 = vmatprep.subr.bf16.mxu0 0
      %498 = vmatpush1.bf16.msra.mxu0 0
      %499 = vmatprep.subr.bf16.mxu0 0
      %500 = vmatpush1.bf16.msra.mxu0 0
      %501 = vmatprep.subr.bf16.mxu0 0
      %502 = vmatpush1.bf16.msra.mxu0 0
      %503 = vmatprep.subr.bf16.mxu0 0
      %504 = vmatpush1.bf16.msra.mxu0 0
      %505 = vmatprep.subr.bf16.mxu0 0
      %506 = vmatpush1.bf16.msra.mxu0 0
      %507 = vmatprep.subr.bf16.mxu0 0
      %508 = vmatpush1.bf16.msra.mxu0 0
      %509 = vmatprep.subr.bf16.mxu0 0
      %510 = vmatpush1.bf16.msra.mxu0 0
      %511 = vmatprep.subr.bf16.mxu0 0
      %512 = vmatpush1.bf16.msra.mxu0 0
      %513 = vmatprep.subr.bf16.mxu0 0
      %514 = vmatpush1.bf16.msra.mxu0 0
      %515 = vmatprep.subr.bf16.mxu0 0
      %516 = vmatpush1.bf16.msra.mxu0 0
      %517 = vmatprep.subr.bf16.mxu0 0
      %518 = vmatpush1.bf16.msra.mxu0 0
      %519 = vmatprep.subr.bf16.mxu0 0
      %520 = vmatpush1.bf16.msra.mxu0 0
      %521 = vmatprep.subr.bf16.mxu0 0
      %522 = vmatpush1.bf16.msra.mxu0 0
      %523 = vmatprep.mubr.bf16.mxu0 0
      %524 = vmatmul.mubr.bf16.gmra.mrb[0].mxu0 %v407
      %v525 = vpop.f32.mrb[0].mxu0
      %v526 = vadd.f32 0.0, %v525
      %v527 = vpop.f32.mrb[0].mxu0
      %v528 = vadd.f32 0.0, %v527
      %v529 = vpop.f32.mrb[0].mxu0
      %v530 = vpop.f32.mrb[0].mxu0
      %531 = vdwg.mxu0
      %532 = vmatprep.subr.bf16.mxu0 %v352
      %533 = vmatpush1.bf16.msra.mxu0 %v351
      %534 = vmatprep.subr.bf16.mxu0 %v362
      %535 = vmatpush1.bf16.msra.mxu0 %v361
      %536 = vmatprep.subr.bf16.mxu0 %v372
      %537 = vmatpush1.bf16.msra.mxu0 %v371
      %538 = vmatprep.subr.bf16.mxu0 0
      %539 = vmatpush1.bf16.msra.mxu0 0
      %540 = vmatprep.subr.bf16.mxu0 0
      %541 = vmatpush1.bf16.msra.mxu0 0
      %542 = vmatprep.subr.bf16.mxu0 0
      %543 = vmatpush1.bf16.msra.mxu0 0
      %544 = vmatprep.subr.bf16.mxu0 0
      %545 = vmatpush1.bf16.msra.mxu0 0
      %546 = vmatprep.subr.bf16.mxu0 0
      %547 = vmatpush1.bf16.msra.mxu0 0
      %548 = vmatprep.subr.bf16.mxu0 0
      %549 = vmatpush1.bf16.msra.mxu0 0
      %550 = vmatprep.subr.bf16.mxu0 0
      %551 = vmatpush1.bf16.msra.mxu0 0
      %552 = vmatprep.subr.bf16.mxu0 0
      %553 = vmatpush1.bf16.msra.mxu0 0
      %554 = vmatprep.subr.bf16.mxu0 0
      %555 = vmatpush1.bf16.msra.mxu0 0
      %556 = vmatprep.subr.bf16.mxu0 0
      %557 = vmatpush1.bf16.msra.mxu0 0
      %558 = vmatprep.subr.bf16.mxu0 0
      %559 = vmatpush1.bf16.msra.mxu0 0
      %560 = vmatprep.subr.bf16.mxu0 0
      %561 = vmatpush1.bf16.msra.mxu0 0
      %562 = vmatprep.subr.bf16.mxu0 0
      %563 = vmatpush1.bf16.msra.mxu0 0
      %564 = vmatprep.mubr.bf16.mxu0 0
      %565 = vmatmul.mubr.bf16.gmra.mrb[0].mxu0 %v407
      %v566 = vpop.f32.mrb[0].mxu0
      %v567 = vadd.f32 0.0, %v566
      %v568 = vpop.f32.mrb[0].mxu0
      %v569 = vadd.f32 0.0, %v568
      %v570 = vpop.f32.mrb[0].mxu0
      %v571 = vpop.f32.mrb[0].mxu0
      %572 = vdwg.mxu0
      %573 = vmatprep.subr.bf16.mxu0 %v354
      %574 = vmatpush1.bf16.msra.mxu0 %v353
      %575 = vmatprep.subr.bf16.mxu0 %v364
      %576 = vmatpush1.bf16.msra.mxu0 %v363
      %577 = vmatprep.subr.bf16.mxu0 %v374
      %578 = vmatpush1.bf16.msra.mxu0 %v373
      %579 = vmatprep.subr.bf16.mxu0 0
      %580 = vmatpush1.bf16.msra.mxu0 0
      %581 = vmatprep.subr.bf16.mxu0 0
      %582 = vmatpush1.bf16.msra.mxu0 0
      %583 = vmatprep.subr.bf16.mxu0 0
      %584 = vmatpush1.bf16.msra.mxu0 0
      %585 = vmatprep.subr.bf16.mxu0 0
      %586 = vmatpush1.bf16.msra.mxu0 0
      %587 = vmatprep.subr.bf16.mxu0 0
      %588 = vmatpush1.bf16.msra.mxu0 0
      %589 = vmatprep.subr.bf16.mxu0 0
      %590 = vmatpush1.bf16.msra.mxu0 0
      %591 = vmatprep.subr.bf16.mxu0 0
      %592 = vmatpush1.bf16.msra.mxu0 0
      %593 = vmatprep.subr.bf16.mxu0 0
      %594 = vmatpush1.bf16.msra.mxu0 0
      %595 = vmatprep.subr.bf16.mxu0 0
      %596 = vmatpush1.bf16.msra.mxu0 0
      %597 = vmatprep.subr.bf16.mxu0 0
      %598 = vmatpush1.bf16.msra.mxu0 0
      %599 = vmatprep.subr.bf16.mxu0 0
      %600 = vmatpush1.bf16.msra.mxu0 0
      %601 = vmatprep.subr.bf16.mxu0 0
      %602 = vmatpush1.bf16.msra.mxu0 0
      %603 = vmatprep.subr.bf16.mxu0 0
      %604 = vmatpush1.bf16.msra.mxu0 0
      %605 = vmatprep.mubr.bf16.mxu0 0
      %606 = vmatmul.mubr.bf16.gmra.mrb[0].mxu0 %v407
      %v607 = vpop.f32.mrb[0].mxu0
      %v608 = vadd.f32 0.0, %v607
      %v609 = vpop.f32.mrb[0].mxu0
      %v610 = vadd.f32 0.0, %v609
      %v611 = vpop.f32.mrb[0].mxu0
      %v612 = vpop.f32.mrb[0].mxu0
      %613 = vdwg.mxu0
      %v614 = vld [vmem:[%s2] sm:$0xff]
      %616 = vset.pattern.permute.xlu0 0
      %617 = vperm.xlu0 %616, %v614
      %v618 = vpop.permute.xlu0 %617
      %v620 = vmul.f32 %v444, %v618
      %v621 = vmul.f32 %v446, %v618
      %v622 = vmul.f32 %v485, %v618
      %v623 = vmul.f32 %v487, %v618
      %v624 = vmul.f32 %v526, %v618
      %v625 = vmul.f32 %v528, %v618
      %v626 = vmul.f32 %v567, %v618
      %v627 = vmul.f32 %v569, %v618
      %v628 = vmul.f32 %v608, %v618
      %v629 = vmul.f32 %v610, %v618
      %630 = vset.pattern.permute.xlu0 1
      %631 = vperm.xlu0 %630, %v614
      %v632 = vpop.permute.xlu0 %631
      %v634 = vadd.f32 %v620, %v632
      %v635 = vadd.f32 %v621, %v632
      %v636 = vadd.f32 %v622, %v632
      %v637 = vadd.f32 %v623, %v632
      %v638 = vadd.f32 %v624, %v632
      %v639 = vadd.f32 %v625, %v632
      %v640 = vadd.f32 %v626, %v632
      %v641 = vadd.f32 %v627, %v632
      %v642 = vadd.f32 %v628, %v632
      %v643 = vadd.f32 %v629, %v632
      %644 = vset.pattern.permute.xlu0 2
      %645 = vperm.xlu0 %644, %v614
      %v646 = vpop.permute.xlu0 %645
      %648 = vset.pattern.permute.xlu0 3
      %649 = vperm.xlu0 %648, %v614
      %v650 = vpop.permute.xlu0 %649
      %652 = vset.pattern.permute.xlu0 4
      %653 = vperm.xlu0 %652, %v614
      %v654 = vpop.permute.xlu0 %653
      %656 = vset.pattern.permute.xlu0 5
      %657 = vperm.xlu0 %656, %v614
      %v658 = vpop.permute.xlu0 %657
      %v660 = vxor.u32 %v634, 2147483648
      %v661 = vxor.u32 %v635, 2147483648
      %v662 = vmul.f32 %v660, 1.442695
      %v663 = vpow.pop %v662
      %v664 = vmul.f32 %v661, 1.442695
      %v665 = vpow.pop %v664
      %v666 = vadd.f32 %v663, 1.0
      %v667 = vadd.f32 %v665, 1.0
      %v668 = vrcp.pop %v666
      %v669 = vmul.f32 1.0, %v668
      %v670 = vrcp.pop %v667
      %v671 = vmul.f32 1.0, %v670
      %v672 = vmul.f32 %v646, 0.0
      %v673 = vmul.f32 %v654, %v669
      %v674 = vmul.f32 %v654, %v671
      %v675 = vadd.f32 %v650, %v673
      %v676 = vadd.f32 %v650, %v674
      %v677 = vrcp.pop %v675
      %v678 = vmul.f32 %v672, %v677
      %v679 = vrcp.pop %v676
      %v680 = vmul.f32 %v672, %v679
      %v681 = vmul.f32 %v634, %v658
      %v682 = vmul.f32 %v635, %v658
      %v683 = vadd.f32 %v678, %v681
      %v684 = vadd.f32 %v680, %v682
      %v685 = vxor.u32 %v683, 2147483648
      %v686 = vxor.u32 %v684, 2147483648
      %v687 = vmul.f32 %v685, 1.442695
      %v688 = vpow.pop %v687
      %v689 = vmul.f32 %v686, 1.442695
      %v690 = vpow.pop %v689
      %v691 = vadd.f32 %v688, 1.0
      %v692 = vadd.f32 %v690, 1.0
      %v693 = vrcp.pop %v691
      %v694 = vmul.f32 1.0, %v693
      %v695 = vrcp.pop %v692
      %v696 = vmul.f32 1.0, %v695
      %v697 = vxor.u32 %v636, 2147483648
      %v698 = vxor.u32 %v637, 2147483648
      %v699 = vmul.f32 %v697, 1.442695
      %v700 = vpow.pop %v699
      %v701 = vmul.f32 %v698, 1.442695
      %v702 = vpow.pop %v701
      %v703 = vadd.f32 %v700, 1.0
      %v704 = vadd.f32 %v702, 1.0
      %v705 = vrcp.pop %v703
      %v706 = vmul.f32 1.0, %v705
      %v707 = vrcp.pop %v704
      %v708 = vmul.f32 1.0, %v707
      %v709 = vmul.f32 %v646, %v694
      %v710 = vmul.f32 %v646, %v696
      %v711 = vmul.f32 %v654, %v706
      %v712 = vmul.f32 %v654, %v708
      %v713 = vadd.f32 %v650, %v711
      %v714 = vadd.f32 %v650, %v712
      %v715 = vrcp.pop %v713
      %v716 = vmul.f32 %v709, %v715
      %v717 = vrcp.pop %v714
      %v718 = vmul.f32 %v710, %v717
      %v719 = vmul.f32 %v636, %v658
      %v720 = vmul.f32 %v637, %v658
      %v721 = vadd.f32 %v716, %v719
      %v722 = vadd.f32 %v718, %v720
      %v723 = vxor.u32 %v721, 2147483648
      %v724 = vxor.u32 %v722, 2147483648
      %v725 = vmul.f32 %v723, 1.442695
      %v726 = vpow.pop %v725
      %v727 = vmul.f32 %v724, 1.442695
      %v728 = vpow.pop %v727
      %v729 = vadd.f32 %v726, 1.0
      %v730 = vadd.f32 %v728, 1.0
      %v731 = vrcp.pop %v729
      %v732 = vmul.f32 1.0, %v731
      %v733 = vrcp.pop %v730
      %v734 = vmul.f32 1.0, %v733
      %v735 = vxor.u32 %v638, 2147483648
      %v736 = vxor.u32 %v639, 2147483648
      %v737 = vmul.f32 %v735, 1.442695
      %v738 = vpow.pop %v737
      %v739 = vmul.f32 %v736, 1.442695
      %v740 = vpow.pop %v739
      %v741 = vadd.f32 %v738, 1.0
      %v742 = vadd.f32 %v740, 1.0
      %v743 = vrcp.pop %v741
      %v744 = vmul.f32 1.0, %v743
      %v745 = vrcp.pop %v742
      %v746 = vmul.f32 1.0, %v745
      %v747 = vmul.f32 %v646, %v732
      %v748 = vmul.f32 %v646, %v734
      %v749 = vmul.f32 %v654, %v744
      %v750 = vmul.f32 %v654, %v746
      %v751 = vadd.f32 %v650, %v749
      %v752 = vadd.f32 %v650, %v750
      %v753 = vrcp.pop %v751
      %v754 = vmul.f32 %v747, %v753
      %v755 = vrcp.pop %v752
      %v756 = vmul.f32 %v748, %v755
      %v757 = vmul.f32 %v638, %v658
      %v758 = vmul.f32 %v639, %v658
      %v759 = vadd.f32 %v754, %v757
      %v760 = vadd.f32 %v756, %v758
      %v761 = vxor.u32 %v759, 2147483648
      %v762 = vxor.u32 %v760, 2147483648
      %v763 = vmul.f32 %v761, 1.442695
      %v764 = vpow.pop %v763
      %v765 = vmul.f32 %v762, 1.442695
      %v766 = vpow.pop %v765
      %v767 = vadd.f32 %v764, 1.0
      %v768 = vadd.f32 %v766, 1.0
      %v769 = vrcp.pop %v767
      %v770 = vmul.f32 1.0, %v769
      %v771 = vrcp.pop %v768
      %v772 = vmul.f32 1.0, %v771
      %v773 = vxor.u32 %v640, 2147483648
      %v774 = vxor.u32 %v641, 2147483648
      %v775 = vmul.f32 %v773, 1.442695
      %v776 = vpow.pop %v775
      %v777 = vmul.f32 %v774, 1.442695
      %v778 = vpow.pop %v777
      %v779 = vadd.f32 %v776, 1.0
      %v780 = vadd.f32 %v778, 1.0
      %v781 = vrcp.pop %v779
      %v782 = vmul.f32 1.0, %v781
      %v783 = vrcp.pop %v780
      %v784 = vmul.f32 1.0, %v783
      %v785 = vmul.f32 %v646, %v770
      %v786 = vmul.f32 %v646, %v772
      %v787 = vmul.f32 %v654, %v782
      %v788 = vmul.f32 %v654, %v784
      %v789 = vadd.f32 %v650, %v787
      %v790 = vadd.f32 %v650, %v788
      %v791 = vrcp.pop %v789
      %v792 = vmul.f32 %v785, %v791
      %v793 = vrcp.pop %v790
      %v794 = vmul.f32 %v786, %v793
      %v795 = vmul.f32 %v640, %v658
      %v796 = vmul.f32 %v641, %v658
      %v797 = vadd.f32 %v792, %v795
      %v798 = vadd.f32 %v794, %v796
      %v799 = vxor.u32 %v797, 2147483648
      %v800 = vxor.u32 %v798, 2147483648
      %v801 = vmul.f32 %v799, 1.442695
      %v802 = vpow.pop %v801
      %v803 = vmul.f32 %v800, 1.442695
      %v804 = vpow.pop %v803
      %v805 = vadd.f32 %v802, 1.0
      %v806 = vadd.f32 %v804, 1.0
      %v807 = vrcp.pop %v805
      %v808 = vmul.f32 1.0, %v807
      %v809 = vrcp.pop %v806
      %v810 = vmul.f32 1.0, %v809
      %v811 = vxor.u32 %v642, 2147483648
      %v812 = vxor.u32 %v643, 2147483648
      %v813 = vmul.f32 %v811, 1.442695
      %v814 = vpow.pop %v813
      %v815 = vmul.f32 %v812, 1.442695
      %v816 = vpow.pop %v815
      %v817 = vadd.f32 %v814, 1.0
      %v818 = vadd.f32 %v816, 1.0
      %v819 = vrcp.pop %v817
      %v820 = vmul.f32 1.0, %v819
      %v821 = vrcp.pop %v818
      %v822 = vmul.f32 1.0, %v821
      %v823 = vmul.f32 %v646, %v808
      %v824 = vmul.f32 %v646, %v810
      %v825 = vmul.f32 %v654, %v820
      %v826 = vmul.f32 %v654, %v822
      %v827 = vadd.f32 %v650, %v825
      %v828 = vadd.f32 %v650, %v826
      %v829 = vrcp.pop %v827
      %v830 = vmul.f32 %v823, %v829
      %v831 = vrcp.pop %v828
      %v832 = vmul.f32 %v824, %v831
      %v833 = vmul.f32 %v642, %v658
      %v834 = vmul.f32 %v643, %v658
      %v835 = vadd.f32 %v830, %v833
      %v836 = vadd.f32 %v832, %v834
      %v837 = vxor.u32 %v835, 2147483648
      %v838 = vxor.u32 %v836, 2147483648
      %v839 = vmul.f32 %v837, 1.442695
      %v840 = vpow.pop %v839
      %v841 = vmul.f32 %v838, 1.442695
      %v842 = vpow.pop %v841
      %v843 = vadd.f32 %v840, 1.0
      %v844 = vadd.f32 %v842, 1.0
      %v845 = vrcp.pop %v843
      %v846 = vmul.f32 1.0, %v845
      %v847 = vrcp.pop %v844
      %v848 = vmul.f32 1.0, %v847
      %v849 = vld [vmem:[%s3] sm:$0xff]
      %v850 = vld [vmem:[%s3 + $0x8] sm:$0xff]
      %v851 = vmul.f32 %v846, %v849
      %v852 = vmul.f32 %v848, %v850
      %v853 = vadd.f32 %v851, %v852
      %854 = vadd.xlane.f32.xlu0 %v853
      %v855 = vpop.xlane.xlu0 %854
      %v856 = vrot.slane %v855, 4
      %v857 = vadd.f32 %v855, %v856
      %v858 = vrot.slane %v857, 2
      %v859 = vadd.f32 %v857, %v858
      %v860 = vrot.slane %v859, 1
      %v861 = vadd.f32 %v859, %v860
      %v862 = vld [vmem:[#allocation2] sm:$0x1]
      %v863 = vadd.f32 %v861, %v862
      %v864 = vxor.u32 %v863, 2147483648
      %v865 = vmul.f32 %v864, 1.442695
      %v866 = vpow.pop %v865
      %v867 = vadd.f32 %v866, 1.0
      %v868 = vrcp.pop %v867
      %v869 = vmul.f32 1.0, %v868
      %vm870 = vcmask 0
      %871 = vst.msk [vmem:[%s222] sm:$0x1] %vm870, %v869
      %p872 = scmp.lt.s32.totalorder %s18, 1
      %s873 = scalar_select %p872, %s18, 1
      %s874 = scalar_lea.vmem %s5, %s873
      // Predicated region
      $region41: #{spikefpn_ncars_forward.1} parent=39 // pred_check
        %p875 = pneg %p146
      $region42: #{spikefpn_ncars_forward.1} parent=39 // pred_check_branch
        %877 = sbr.rel (%p875) target = $region44
      $region43: #{spikefpn_ncars_forward.1} parent=39 // pred_region
        _
      $region44: #{spikefpn_ncars_forward.1} parent=39 // pred_fallthru
        _
    $region40: #{spikefpn_ncars_forward.1} parent=5 // pred_fallthru
      _
    %p878 = scmp.le.s32.totalorder 2, %s13
    // Predicated region
    $region45: #{spikefpn_ncars_forward.1} parent=5 // pred_check
      %p879 = pneg %p878
    $region46: #{spikefpn_ncars_forward.1} parent=5 // pred_check_branch
      %881 = sbr.rel (%p879) target = $region48
    $region47: #{spikefpn_ncars_forward.1} parent=5 // pred_region
      %s882 = ssub.s32 %s13, 2
      // Predicated region
      $region49: #{spikefpn_ncars_forward.1} parent=47 // pred_check
        %p883 = pneg %p152
      $region50: #{spikefpn_ncars_forward.1} parent=47 // pred_check_branch
        %885 = sbr.rel (%p883) target = $region52
      $region51: #{spikefpn_ncars_forward.1} parent=47 // pred_region
        %p886 = scmp.lt.s32.totalorder %s19, 1
        %s887 = scalar_select %p886, %s19, 1
        %s888 = scalar_lea.vmem %s5, %s887
      $region52: #{spikefpn_ncars_forward.1} parent=47 // pred_fallthru
        _
    $region48: #{spikefpn_ncars_forward.1} parent=5 // pred_fallthru
      _
  $region6: #{spikefpn_ncars_forward.1} parent=0 // loop_footer
    %s17 = sadd.s32 1, %s13
  $region7: #{spikefpn_ncars_forward.1} parent=0 // loop_footer_branch
    %12 = sbr.rel target = $region3
  $region8: #{spikefpn_ncars_forward.1} parent=0 // loop_exit
    _

</llo_original>
